<compile_context>
chip_gen: v7x
topology: tpu7x:2x2x1
jax: 0.10.0
libtpu: 0.0.40
codegen_flags: <defaults>
</compile_context>

<pallas_src>
import jax
import jax.numpy as jnp
from jax.experimental import pallas as pl
from jax.experimental.pallas import tpu as pltpu

LANE = 128


def _round_up(x, m):
    return (x + m - 1) // m * m


def _critic_kernel(x_ref, w1_ref, b1_ref, w2_ref, b2_ref, w3_ref, b3_ref,
                   out_ref):
    """Fused 3-layer MLP; ReLU hidden activations, linear scalar head."""
    # Cast the f32 x tile to the weight/compute dtype in-kernel (VPU slack);
    # this keeps the dominant HBM stream at a single f32 read of x.
    x = x_ref[...].astype(w1_ref.dtype)

    # Layer 1: MXU matmul, f32 accumulate; bias add + ReLU in f32.
    h = jnp.dot(x, w1_ref[...], preferred_element_type=jnp.float32)
    h = jnp.maximum(h + b1_ref[...], 0.0)

    # Layer 2: cast activations to the weight dtype for the bf16 MXU path.
    h = jnp.dot(h.astype(w2_ref.dtype), w2_ref[...],
                preferred_element_type=jnp.float32)
    h = jnp.maximum(h + b2_ref[...], 0.0)

    # Head (out_features == 1): lane reduction (VPU/XLU) beats an N=1 matmul.
    v = jnp.sum(h * w3_ref[...], axis=-1, keepdims=True) + b3_ref[...]

    # Lane-dense store: relayout (tile_b, 1) -> (1, tile_b//128, 128).
    out_ref[...] = v.reshape(out_ref.shape).astype(out_ref.dtype)


def prepare_params(params, compute_dtype=jnp.bfloat16, lane=LANE):
    """Pad hidden dims to the 128-lane width; head weight laid out as a
    (1, h2) row. Zero padding is exact (padded units contribute nothing)."""
    w1, b1, w2, b2, w3, b3 = params
    h1, h2 = w1.shape[1], w2.shape[1]
    h1p, h2p = _round_up(h1, lane), _round_up(h2, lane)

    w1p = jnp.pad(w1, ((0, 0), (0, h1p - h1))).astype(compute_dtype)
    b1p = jnp.pad(b1, ((0, 0), (0, h1p - h1))).astype(jnp.float32)
    w2p = jnp.pad(w2, ((0, h1p - h1), (0, h2p - h2))).astype(compute_dtype)
    b2p = jnp.pad(b2, ((0, 0), (0, h2p - h2))).astype(jnp.float32)
    w3p = jnp.pad(w3, ((0, h2p - h2), (0, 0))).astype(jnp.float32).T  # (1,h2p)
    b3p = b3.astype(jnp.float32)                                      # (1,1)
    return w1p, b1p, w2p, b2p, w3p, b3p


def _pick_tiling(batch, state_dim, x_itemsize, h1p, h2p, max_tile_b,
                 vmem_budget_bytes):
    """Roughly-equal 128-aligned batch tiles, >=2 (even) tiles for the v7x
    megacore once batch >= 1024, clamped to a conservative VMEM budget."""
    aligned = _round_up(batch, LANE)
    min_tiles = 2 if batch >= 1024 else 1
    num_tiles = max(min_tiles, pl.cdiv(aligned, max(LANE, max_tile_b)))
    tile_b = _round_up(pl.cdiv(aligned, num_tiles), LANE)

    # VMEM clamp: 2x-buffered x tile + f32/bf16 activation slabs + 2x output.
    bytes_per_row = (2 * state_dim * x_itemsize   # x tile, double buffered
                     + 6 * (h1p + h2p)            # activation slabs (generous)
                     + 2 * 4)                     # output, double buffered
    max_rows = max(LANE, (vmem_budget_bytes // bytes_per_row) // LANE * LANE)
    tile_b = min(tile_b, max_rows)

    num_tiles = pl.cdiv(aligned, tile_b)
    if num_tiles > 1 and num_tiles % 2:
        num_tiles += 1            # even step count splits cleanly across 2 TCs
    tile_b = min(tile_b, _round_up(pl.cdiv(aligned, num_tiles), LANE))
    return num_tiles, tile_b


def critic_net_forward(x, params, *, compute_dtype=jnp.bfloat16,
                       max_tile_b=2048, vmem_budget_bytes=12 * 2**20):
    """Run the fused CriticNet forward. Returns shape (batch,) float32."""
    batch, state_dim = x.shape
    prepared = prepare_params(params, compute_dtype)
    w1p, b1p, w2p, b2p, w3p, b3p = prepared
    h1p, h2p = w1p.shape[1], w2p.shape[1]

    num_tiles, tile_b = _pick_tiling(batch, state_dim, x.dtype.itemsize,
                                     h1p, h2p, max_tile_b, vmem_budget_bytes)
    padded_batch = num_tiles * tile_b
    sub = tile_b // LANE

    # No dtype cast of x in the wrapper; pad rows only if the batch is not
    # already tile-aligned (padded rows are zero and sliced off afterwards).
    x_in = x if padded_batch == batch else jnp.pad(
        x, ((0, padded_batch - batch), (0, 0)))

    # x / out march along the batch grid; weights use constant index_maps so
    # they are DMA'd once and stay resident in VMEM across grid iterations.
    x_spec = pl.BlockSpec((tile_b, state_dim), lambda i: (i, 0))
    out_spec = pl.BlockSpec((1, sub, LANE), lambda i: (i, 0, 0))
    resident = lambda a: pl.BlockSpec(a.shape, lambda i: (0, 0))

    flops = 2 * padded_batch * (state_dim * h1p + h1p * h2p + h2p)
    bytes_accessed = (padded_batch * state_dim * x.dtype.itemsize
                      + sum(int(p.size) * p.dtype.itemsize for p in prepared)
                      + padded_batch * 4)

    out = pl.pallas_call(
        _critic_kernel,
        grid=(num_tiles,),
        in_specs=[x_spec] + [resident(p) for p in prepared],
        out_specs=out_spec,
        out_shape=jax.ShapeDtypeStruct((num_tiles, sub, LANE), jnp.float32),
        compiler_params=pltpu.CompilerParams(
            dimension_semantics=("parallel",)),
        cost_estimate=pl.CostEstimate(
            flops=flops, transcendentals=0, bytes_accessed=bytes_accessed),
    )(x_in, *prepared)

    # model(x)[:, 0]: flatten the lane-dense tiles back to (batch,).
    return out.reshape(padded_batch)[:batch]


def init_params(key, state_dim, hidden_sizes):
    """Deterministic nn.Linear-style uniform init; weights stored (in, out)
    for x @ W; biases as (1, out) rows."""
    dims = [state_dim] + list(hidden_sizes) + [1]
    params = []
    for din, dout in zip(dims[:-1], dims[1:]):
        key, kw, kb = jax.random.split(key, 3)
        scale = 1.0 / jnp.sqrt(jnp.float32(din))
        w = jax.random.uniform(kw, (din, dout), jnp.float32, -scale, scale)
        b = jax.random.uniform(kb, (1, dout), jnp.float32, -scale, scale)
        params.extend([w, b])
    return tuple(params)


def reference_forward(x, params):
    """Pure-JAX f32 reference matching the PyTorch module."""
    w1, b1, w2, b2, w3, b3 = params
    h = jnp.maximum(x @ w1 + b1, 0.0)
    h = jnp.maximum(h @ w2 + b2, 0.0)
    return (h @ w3 + b3)[:, 0]


def reference_forward_matched(x, prepared):
    """Pure-JAX reference with the same bf16 casts / padded layout as the
    kernel (isolates kernel bugs from expected bf16 rounding)."""
    w1, b1, w2, b2, w3r, b3 = prepared
    h = jnp.dot(x.astype(w1.dtype), w1, preferred_element_type=jnp.float32)
    h = jnp.maximum(h + b1, 0.0)
    h = jnp.dot(h.astype(w2.dtype), w2, preferred_element_type=jnp.float32)
    h = jnp.maximum(h + b2, 0.0)
    return jnp.sum(h * w3r, axis=-1) + b3[0, 0]


if __name__ == "__main__":
    key = jax.random.PRNGKey(0)

    # Small shapes consistent with the module: batch=8, state_dim=32, hidden=(64, 64).
    batch, state_dim, hidden_sizes = 8, 32, (64, 64)
    key, kx = jax.random.split(key)
    x = jax.random.normal(kx, (batch, state_dim), jnp.float32)
    params = init_params(key, state_dim, hidden_sizes)
    ref = reference_forward(x, params)

    # Full-precision path: must match the f32 reference tightly.
    out_f32 = jax.block_until_ready(
        critic_net_forward(x, params, compute_dtype=jnp.float32))
    assert out_f32.shape == (batch,), out_f32.shape
    assert jnp.allclose(out_f32, ref, atol=1e-4, rtol=1e-4), (out_f32, ref)

    # Default bf16 compute path: tight check against a cast-matched reference,
    # loose sanity check against the f32 reference.
    out_bf16 = jax.block_until_ready(critic_net_forward(x, params))
    ref_bf16 = reference_forward_matched(x, prepare_params(params))
    assert out_bf16.shape == (batch,), out_bf16.shape
    assert jnp.allclose(out_bf16, ref_bf16, atol=1e-3, rtol=1e-3), (
        out_bf16, ref_bf16)
    assert jnp.allclose(out_bf16, ref, atol=5e-2, rtol=5e-2), (out_bf16, ref)

    # Awkward batch exercising the multi-tile (>=2 grid steps) path and the
    # lane-dense output re-flattening across tiles.
    batch2 = 1050
    key, kx2 = jax.random.split(key)
    x2 = jax.random.normal(kx2, (batch2, state_dim), jnp.float32)
    ref2 = reference_forward(x2, params)
    out2 = jax.block_until_ready(
        critic_net_forward(x2, params, compute_dtype=jnp.float32))
    assert out2.shape == (batch2,), out2.shape
    assert jnp.allclose(out2, ref2, atol=1e-4, rtol=1e-4), (out2, ref2)

    print("KERNEL_OK")
</pallas_src>

<mosaic_0001>
module attributes {stable_mosaic.version = 11 : i64} {
  func.func @_critic_kernel(%arg0: i32, %arg1: memref<128x32xf32, #tpu.memory_space<vmem>>, %arg2: memref<32x128xf32, #tpu.memory_space<vmem>>, %arg3: memref<1x128xf32, #tpu.memory_space<vmem>>, %arg4: memref<128x128xf32, #tpu.memory_space<vmem>>, %arg5: memref<1x128xf32, #tpu.memory_space<vmem>>, %arg6: memref<1x128xf32, #tpu.memory_space<vmem>>, %arg7: memref<1x1xf32, #tpu.memory_space<vmem>>, %arg8: memref<1x1x128xf32, #tpu.memory_space<vmem>>) attributes {dimension_semantics = [#tpu.dimension_semantics<parallel>], iteration_bounds = array<i64: 1>, scalar_prefetch = 0 : i64, scratch_operands = 0 : i64, tpu.core_type = #tpu.core_type<tc>, window_params = [{transform_indices = @transform_0, window_bounds = array<i64: 128, 32>}, {pipeline_mode = #tpu.pipeline_mode<synchronous>, transform_indices = @transform_1, window_bounds = array<i64: 32, 128>}, {pipeline_mode = #tpu.pipeline_mode<synchronous>, transform_indices = @transform_2, window_bounds = array<i64: 1, 128>}, {pipeline_mode = #tpu.pipeline_mode<synchronous>, transform_indices = @transform_3, window_bounds = array<i64: 128, 128>}, {pipeline_mode = #tpu.pipeline_mode<synchronous>, transform_indices = @transform_4, window_bounds = array<i64: 1, 128>}, {pipeline_mode = #tpu.pipeline_mode<synchronous>, transform_indices = @transform_5, window_bounds = array<i64: 1, 128>}, {pipeline_mode = #tpu.pipeline_mode<synchronous>, transform_indices = @transform_6, window_bounds = array<i64: 1, 1>}, {transform_indices = @transform_7, window_bounds = array<i64: 1, 1, 128>}]} {
    %c0 = arith.constant 0 : index
    %c0_0 = arith.constant 0 : index
    %0 = vector.load %arg1[%c0, %c0_0] : memref<128x32xf32, #tpu.memory_space<vmem>>, vector<128x32xf32>
    %c0_1 = arith.constant 0 : index
    %c0_2 = arith.constant 0 : index
    %1 = vector.load %arg2[%c0_1, %c0_2] : memref<32x128xf32, #tpu.memory_space<vmem>>, vector<32x128xf32>
    %cst = arith.constant dense<0.000000e+00> : vector<128x128xf32>
    %2 = tpu.matmul %0, %1, %cst {dimension_numbers = #tpu.dot_dimension_numbers<[1], [0], [0], [1], [0, 0, 1, 1], [], []>} : vector<128x32xf32>, vector<32x128xf32>, vector<128x128xf32> -> vector<128x128xf32>
    %c0_3 = arith.constant 0 : index
    %c0_4 = arith.constant 0 : index
    %3 = vector.load %arg3[%c0_3, %c0_4] : memref<1x128xf32, #tpu.memory_space<vmem>>, vector<1x128xf32>
    %4 = vector.broadcast %3 : vector<1x128xf32> to vector<128x128xf32>
    %5 = arith.addf %2, %4 : vector<128x128xf32>
    %cst_5 = arith.constant 0.000000e+00 : f32
    %6 = vector.broadcast %cst_5 : f32 to vector<128x128xf32>
    %7 = arith.maximumf %5, %6 : vector<128x128xf32>
    %c0_6 = arith.constant 0 : index
    %c0_7 = arith.constant 0 : index
    %8 = vector.load %arg4[%c0_6, %c0_7] : memref<128x128xf32, #tpu.memory_space<vmem>>, vector<128x128xf32>
    %cst_8 = arith.constant dense<0.000000e+00> : vector<128x128xf32>
    %9 = tpu.matmul %7, %8, %cst_8 {dimension_numbers = #tpu.dot_dimension_numbers<[1], [0], [0], [1], [0, 0, 1, 1], [], []>} : vector<128x128xf32>, vector<128x128xf32>, vector<128x128xf32> -> vector<128x128xf32>
    %c0_9 = arith.constant 0 : index
    %c0_10 = arith.constant 0 : index
    %10 = vector.load %arg5[%c0_9, %c0_10] : memref<1x128xf32, #tpu.memory_space<vmem>>, vector<1x128xf32>
    %11 = vector.broadcast %10 : vector<1x128xf32> to vector<128x128xf32>
    %12 = arith.addf %9, %11 : vector<128x128xf32>
    %cst_11 = arith.constant 0.000000e+00 : f32
    %13 = vector.broadcast %cst_11 : f32 to vector<128x128xf32>
    %14 = arith.maximumf %12, %13 : vector<128x128xf32>
    %c0_12 = arith.constant 0 : index
    %c0_13 = arith.constant 0 : index
    %15 = vector.load %arg6[%c0_12, %c0_13] : memref<1x128xf32, #tpu.memory_space<vmem>>, vector<1x128xf32>
    %16 = vector.broadcast %15 : vector<1x128xf32> to vector<128x128xf32>
    %17 = arith.mulf %14, %16 : vector<128x128xf32>
    %cst_14 = arith.constant dense<0.000000e+00> : vector<128xf32>
    %18 = vector.multi_reduction <add>, %17, %cst_14 [1] : vector<128x128xf32> to vector<128xf32>
    %19 = vector.shape_cast %18 : vector<128xf32> to vector<128x1xf32>
    %c0_15 = arith.constant 0 : index
    %c0_16 = arith.constant 0 : index
    %20 = vector.load %arg7[%c0_15, %c0_16] : memref<1x1xf32, #tpu.memory_space<vmem>>, vector<1x1xf32>
    %21 = vector.broadcast %20 : vector<1x1xf32> to vector<128x1xf32>
    %22 = arith.addf %19, %21 : vector<128x1xf32>
    %23 = vector.shape_cast %22 : vector<128x1xf32> to vector<1x1x128xf32>
    %c0_17 = arith.constant 0 : index
    %c0_18 = arith.constant 0 : index
    %c0_19 = arith.constant 0 : index
    %24 = vector.load %arg8[%c0_17, %c0_18, %c0_19] : memref<1x1x128xf32, #tpu.memory_space<vmem>>, vector<1x1x128xf32>
    tpu.vector_store %arg8[%c0_17, %c0_18, %c0_19], %23 {strides = array<i32>} : memref<1x1x128xf32, #tpu.memory_space<vmem>>, vector<1x1x128xf32>,
    return
  }
  func.func @transform_0(%arg0: i32) -> (i32, i32) {
    %c0_i32 = arith.constant 0 : i32
    %c0_i32_0 = arith.constant 0 : i32
    return %arg0, %c0_i32 : i32, i32
  }
  func.func @transform_1(%arg0: i32) -> (i32, i32) {
    %c0_i32 = arith.constant 0 : i32
    %c0_i32_0 = arith.constant 0 : i32
    %c0_i32_1 = arith.constant 0 : i32
    return %c0_i32, %c0_i32_0 : i32, i32
  }
  func.func @transform_2(%arg0: i32) -> (i32, i32) {
    %c0_i32 = arith.constant 0 : i32
    %c0_i32_0 = arith.constant 0 : i32
    %c0_i32_1 = arith.constant 0 : i32
    return %c0_i32, %c0_i32_0 : i32, i32
  }
  func.func @transform_3(%arg0: i32) -> (i32, i32) {
    %c0_i32 = arith.constant 0 : i32
    %c0_i32_0 = arith.constant 0 : i32
    %c0_i32_1 = arith.constant 0 : i32
    return %c0_i32, %c0_i32_0 : i32, i32
  }
  func.func @transform_4(%arg0: i32) -> (i32, i32) {
    %c0_i32 = arith.constant 0 : i32
    %c0_i32_0 = arith.constant 0 : i32
    %c0_i32_1 = arith.constant 0 : i32
    return %c0_i32, %c0_i32_0 : i32, i32
  }
  func.func @transform_5(%arg0: i32) -> (i32, i32) {
    %c0_i32 = arith.constant 0 : i32
    %c0_i32_0 = arith.constant 0 : i32
    %c0_i32_1 = arith.constant 0 : i32
    return %c0_i32, %c0_i32_0 : i32, i32
  }
  func.func @transform_6(%arg0: i32) -> (i32, i32) {
    %c0_i32 = arith.constant 0 : i32
    %c0_i32_0 = arith.constant 0 : i32
    %c0_i32_1 = arith.constant 0 : i32
    return %c0_i32, %c0_i32_0 : i32, i32
  }
  func.func @transform_7(%arg0: i32) -> (i32, i32, i32) {
    %c0_i32 = arith.constant 0 : i32
    %c0_i32_0 = arith.constant 0 : i32
    %c0_i32_1 = arith.constant 0 : i32
    return %arg0, %c0_i32, %c0_i32_0 : i32, i32, i32
  }
}

</mosaic_0001>

<llo_original>
// kernel: tpu_custom_call.1
$region0: #{tpu_custom_call.1}
  #allocation0 [shape = 'u32[]', space=smem, size = 0x4, offset = 0x4, fixed_abs, tag = 'smem constant byte address 0x4 - core index']
  #allocation1 [shape = 'u32[144,128]{1,0:T(1,128)}', space=vmem, size = 0x12000, scoped, tag = 'internal scratch']
  #allocation2 [shape = 'f32[1,1]{1,0:T(1,128)S(1)}', space=vmem, size = 0x200, scoped, tag = 'scoped memory for tpu_custom_call.1']
  %s0 = inlined_call_operand.vmem [shape: f32[128,32], index: 0, kind: input, shape index: {}]
  %s1 = inlined_call_operand.vmem [shape: f32[32,128], index: 1, kind: input, shape index: {}]
  %s2 = inlined_call_operand.vmem [shape: f32[1,128], index: 2, kind: input, shape index: {}]
  %s3 = inlined_call_operand.vmem [shape: f32[128,128], index: 3, kind: input, shape index: {}]
  %s4 = inlined_call_operand.vmem [shape: f32[1,128], index: 4, kind: input, shape index: {}]
  %s5 = inlined_call_operand.vmem [shape: f32[1,128], index: 5, kind: input, shape index: {}]
  %s6 = inlined_call_operand.<no memory space> [shape: f32[1,1], index: 6, kind: input, shape index: {}]
  %s7 = inlined_call_operand.hbm [shape: f32[1,1,128], index: 7, kind: output, shape index: {}]
  %s8 = sld [smem:[#allocation0]]
  $region38: #{tpu_custom_call.1} parent=0
    _
  %s10 = ssub.s32 1, %s8
  %s11 = scalar_select 0, %s10, %s8
  %v12 = vstv %s6
  %13 = vst [vmem:[#allocation2] sm:$0x1] %v12
  $region1: #{tpu_custom_call.1} parent=0
    #allocation3 [shape = 'u8[512]{0}', space=vmem, size = 0x400, scoped, tag = 'output window, operand 0, single buffered']
    #allocation4 [shape = 's32[1]{0}', space=sflag, size = 0x4, scoped, tag = 'scoped memory for tpu_custom_call.1']
    %14 = vsyncpa [#allocation4], 0
    // Predicated region
    $region2: #{tpu_custom_call.1} parent=1 // pred_check
      _
    $region3: #{tpu_custom_call.1} parent=1 // pred_check_branch
      %16 = sbr.rel (0) target = $region5
    $region4: #{tpu_custom_call.1} parent=1 // pred_region
      _
    $region5: #{tpu_custom_call.1} parent=1 // pred_fallthru
      _
    // Predicated region
    $region6: #{tpu_custom_call.1} parent=1 // pred_check
      _
    $region7: #{tpu_custom_call.1} parent=1 // pred_check_branch
      %18 = sbr.rel (0) target = $region9
    $region8: #{tpu_custom_call.1} parent=1 // pred_region
      _
    $region9: #{tpu_custom_call.1} parent=1 // pred_fallthru
      _
    // Predicated region
    $region10: #{tpu_custom_call.1} parent=1 // pred_check
      _
    $region11: #{tpu_custom_call.1} parent=1 // pred_check_branch
      %20 = sbr.rel (0) target = $region13
    $region12: #{tpu_custom_call.1} parent=1 // pred_region
      _
    $region13: #{tpu_custom_call.1} parent=1 // pred_fallthru
      _
    // Predicated region
    $region14: #{tpu_custom_call.1} parent=1 // pred_check
      _
    $region15: #{tpu_custom_call.1} parent=1 // pred_check_branch
      %22 = sbr.rel (0) target = $region17
    $region16: #{tpu_custom_call.1} parent=1 // pred_region
      _
    $region17: #{tpu_custom_call.1} parent=1 // pred_fallthru
      _
    // Predicated region
    $region18: #{tpu_custom_call.1} parent=1 // pred_check
      _
    $region19: #{tpu_custom_call.1} parent=1 // pred_check_branch
      %24 = sbr.rel (0) target = $region21
    $region20: #{tpu_custom_call.1} parent=1 // pred_region
      _
    $region21: #{tpu_custom_call.1} parent=1 // pred_fallthru
      _
    // Predicated region
    $region22: #{tpu_custom_call.1} parent=1 // pred_check
      _
    $region23: #{tpu_custom_call.1} parent=1 // pred_check_branch
      %26 = sbr.rel (0) target = $region25
    $region24: #{tpu_custom_call.1} parent=1 // pred_region
      _
    $region25: #{tpu_custom_call.1} parent=1 // pred_fallthru
      _
    // Predicated region
    $region26: #{tpu_custom_call.1} parent=1 // pred_check
      _
    $region27: #{tpu_custom_call.1} parent=1 // pred_check_branch
      %28 = sbr.rel (0) target = $region29
    $region28: #{tpu_custom_call.1} parent=1 // pred_region
      _
    $region29: #{tpu_custom_call.1} parent=1 // pred_fallthru
      _
    %v29 = vld [vmem:[%s0] sm:$0xff]
    %v30 = vld [vmem:[%s0 + $0x8] sm:$0xff]
    %v31 = vld [vmem:[%s0 + $0x10] sm:$0xff]
    %v32 = vld [vmem:[%s0 + $0x18] sm:$0xff]
    %v33 = vld [vmem:[%s0 + $0x20] sm:$0xff]
    %v34 = vld [vmem:[%s0 + $0x28] sm:$0xff]
    %v35 = vld [vmem:[%s0 + $0x30] sm:$0xff]
    %v36 = vld [vmem:[%s0 + $0x38] sm:$0xff]
    %v37 = vld [vmem:[%s0 + $0x40] sm:$0xff]
    %v38 = vld [vmem:[%s0 + $0x48] sm:$0xff]
    %v39 = vld [vmem:[%s0 + $0x50] sm:$0xff]
    %v40 = vld [vmem:[%s0 + $0x58] sm:$0xff]
    %v41 = vld [vmem:[%s0 + $0x60] sm:$0xff]
    %v42 = vld [vmem:[%s0 + $0x68] sm:$0xff]
    %v43 = vld [vmem:[%s0 + $0x70] sm:$0xff]
    %v44 = vld [vmem:[%s0 + $0x78] sm:$0xff]
    %v45 = vld [vmem:[%s1] sm:$0xff]
    %v46 = vld [vmem:[%s1 + $0x8] sm:$0xff]
    %v47 = vld [vmem:[%s1 + $0x10] sm:$0xff]
    %v48 = vld [vmem:[%s1 + $0x18] sm:$0xff]
    %v49 = vld [vmem:[%s2] sm:$0x1]
    %v51 = vlaneseq
    %v52 = vshrl.u32 %v51, 7
    %v53 = vsub.s32 0, %v52
    %v54 = vrot.slane %v49, %v53
    %vm56 = vcmask 261120
    %v58 = vsel %vm56, %v29, 0
    %v61 = vsel %vm56, %v30, 0
    %v64 = vsel %vm56, %v31, 0
    %v67 = vsel %vm56, %v32, 0
    %v70 = vsel %vm56, %v33, 0
    %v73 = vsel %vm56, %v34, 0
    %v76 = vsel %vm56, %v35, 0
    %v79 = vsel %vm56, %v36, 0
    %v82 = vsel %vm56, %v37, 0
    %v85 = vsel %vm56, %v38, 0
    %v88 = vsel %vm56, %v39, 0
    %v91 = vsel %vm56, %v40, 0
    %v94 = vsel %vm56, %v41, 0
    %v97 = vsel %vm56, %v42, 0
    %v100 = vsel %vm56, %v43, 0
    %v103 = vsel %vm56, %v44, 0
    %105 = vmatprep.subr.mxu0 0.0
    %106 = vmatpush1.msra.mxu0 %v45
    %107 = vmatprep.subr.mxu0 0.0
    %108 = vmatpush1.msra.mxu0 %v46
    %109 = vmatprep.subr.mxu0 0.0
    %110 = vmatpush1.msra.mxu0 %v47
    %111 = vmatprep.subr.mxu0 0.0
    %112 = vmatpush1.msra.mxu0 %v48
    %113 = vmatprep.subr.mxu0 0.0
    %114 = vmatpush1.msra.mxu0 0.0
    %115 = vmatprep.subr.mxu0 0.0
    %116 = vmatpush1.msra.mxu0 0.0
    %117 = vmatprep.subr.mxu0 0.0
    %118 = vmatpush1.msra.mxu0 0.0
    %119 = vmatprep.subr.mxu0 0.0
    %120 = vmatpush1.msra.mxu0 0.0
    %121 = vmatprep.subr.mxu0 0.0
    %122 = vmatpush1.msra.mxu0 0.0
    %123 = vmatprep.subr.mxu0 0.0
    %124 = vmatpush1.msra.mxu0 0.0
    %125 = vmatprep.subr.mxu0 0.0
    %126 = vmatpush1.msra.mxu0 0.0
    %127 = vmatprep.subr.mxu0 0.0
    %128 = vmatpush1.msra.mxu0 0.0
    %129 = vmatprep.subr.mxu0 0.0
    %130 = vmatpush1.msra.mxu0 0.0
    %131 = vmatprep.subr.mxu0 0.0
    %132 = vmatpush1.msra.mxu0 0.0
    %133 = vmatprep.subr.mxu0 0.0
    %134 = vmatpush1.msra.mxu0 0.0
    %135 = vmatprep.subr.mxu0 0.0
    %136 = vmatpush1.msra.mxu0 0.0
    %137 = vmatprep.subr.mxu0 0.0
    %138 = vmatpush1.msra.mxu0 0.0
    %139 = vmatprep.subr.mxu0 0.0
    %140 = vmatpush1.msra.mxu0 0.0
    %141 = vmatprep.subr.mxu0 0.0
    %142 = vmatpush1.msra.mxu0 0.0
    %143 = vmatprep.subr.mxu0 0.0
    %144 = vmatpush1.msra.mxu0 0.0
    %145 = vmatprep.subr.mxu0 0.0
    %146 = vmatpush1.msra.mxu0 0.0
    %147 = vmatprep.subr.mxu0 0.0
    %148 = vmatpush1.msra.mxu0 0.0
    %149 = vmatprep.subr.mxu0 0.0
    %150 = vmatpush1.msra.mxu0 0.0
    %151 = vmatprep.subr.mxu0 0.0
    %152 = vmatpush1.msra.mxu0 0.0
    %153 = vmatprep.subr.mxu0 0.0
    %154 = vmatpush1.msra.mxu0 0.0
    %155 = vmatprep.subr.mxu0 0.0
    %156 = vmatpush1.msra.mxu0 0.0
    %157 = vmatprep.subr.mxu0 0.0
    %158 = vmatpush1.msra.mxu0 0.0
    %159 = vmatprep.subr.mxu0 0.0
    %160 = vmatpush1.msra.mxu0 0.0
    %161 = vmatprep.subr.mxu0 0.0
    %162 = vmatpush1.msra.mxu0 0.0
    %163 = vmatprep.subr.mxu0 0.0
    %164 = vmatpush1.msra.mxu0 0.0
    %165 = vmatprep.subr.mxu0 0.0
    %166 = vmatpush1.msra.mxu0 0.0
    %167 = vmatprep.subr.mxu0 0.0
    %168 = vmatpush1.msra.mxu0 0.0
    %169 = vmatprep.mubr.f32.mxu0 0.0
    %170 = vmatmul.mubr.f32.gmra.mrb[0].mxu0 %v58
    %v171 = vpop.f32.mrb[0].mxu0
    %v172 = vadd.f32 %v54, %v171
    %v173 = vpop.f32.mrb[0].mxu0
    %174 = vmatprep.mubr.f32.mxu0 0.0
    %175 = vmatmul.mubr.f32.gmra.mrb[0].mxu0 %v61
    %v176 = vpop.f32.mrb[0].mxu0
    %v177 = vadd.f32 %v54, %v176
    %v178 = vpop.f32.mrb[0].mxu0
    %179 = vmatprep.mubr.f32.mxu0 0.0
    %180 = vmatmul.mubr.f32.gmra.mrb[0].mxu0 %v64
    %v181 = vpop.f32.mrb[0].mxu0
    %v182 = vadd.f32 %v54, %v181
    %v183 = vpop.f32.mrb[0].mxu0
    %184 = vmatprep.mubr.f32.mxu0 0.0
    %185 = vmatmul.mubr.f32.gmra.mrb[0].mxu0 %v67
    %v186 = vpop.f32.mrb[0].mxu0
    %v187 = vadd.f32 %v54, %v186
    %v188 = vpop.f32.mrb[0].mxu0
    %189 = vmatprep.mubr.f32.mxu0 0.0
    %190 = vmatmul.mubr.f32.gmra.mrb[0].mxu0 %v70
    %v191 = vpop.f32.mrb[0].mxu0
    %v192 = vadd.f32 %v54, %v191
    %v193 = vpop.f32.mrb[0].mxu0
    %194 = vmatprep.mubr.f32.mxu0 0.0
    %195 = vmatmul.mubr.f32.gmra.mrb[0].mxu0 %v73
    %v196 = vpop.f32.mrb[0].mxu0
    %v197 = vadd.f32 %v54, %v196
    %v198 = vpop.f32.mrb[0].mxu0
    %199 = vmatprep.mubr.f32.mxu0 0.0
    %200 = vmatmul.mubr.f32.gmra.mrb[0].mxu0 %v76
    %v201 = vpop.f32.mrb[0].mxu0
    %v202 = vadd.f32 %v54, %v201
    %v203 = vpop.f32.mrb[0].mxu0
    %204 = vmatprep.mubr.f32.mxu0 0.0
    %205 = vmatmul.mubr.f32.gmra.mrb[0].mxu0 %v79
    %v206 = vpop.f32.mrb[0].mxu0
    %v207 = vadd.f32 %v54, %v206
    %v208 = vpop.f32.mrb[0].mxu0
    %209 = vmatprep.mubr.f32.mxu0 0.0
    %210 = vmatmul.mubr.f32.gmra.mrb[0].mxu0 %v82
    %v211 = vpop.f32.mrb[0].mxu0
    %v212 = vadd.f32 %v54, %v211
    %v213 = vpop.f32.mrb[0].mxu0
    %214 = vmatprep.mubr.f32.mxu0 0.0
    %215 = vmatmul.mubr.f32.gmra.mrb[0].mxu0 %v85
    %v216 = vpop.f32.mrb[0].mxu0
    %v217 = vadd.f32 %v54, %v216
    %v218 = vpop.f32.mrb[0].mxu0
    %219 = vmatprep.mubr.f32.mxu0 0.0
    %220 = vmatmul.mubr.f32.gmra.mrb[0].mxu0 %v88
    %v221 = vpop.f32.mrb[0].mxu0
    %v222 = vadd.f32 %v54, %v221
    %v223 = vpop.f32.mrb[0].mxu0
    %224 = vmatprep.mubr.f32.mxu0 0.0
    %225 = vmatmul.mubr.f32.gmra.mrb[0].mxu0 %v91
    %v226 = vpop.f32.mrb[0].mxu0
    %v227 = vadd.f32 %v54, %v226
    %v228 = vpop.f32.mrb[0].mxu0
    %229 = vmatprep.mubr.f32.mxu0 0.0
    %230 = vmatmul.mubr.f32.gmra.mrb[0].mxu0 %v94
    %v231 = vpop.f32.mrb[0].mxu0
    %v232 = vadd.f32 %v54, %v231
    %v233 = vpop.f32.mrb[0].mxu0
    %234 = vmatprep.mubr.f32.mxu0 0.0
    %235 = vmatmul.mubr.f32.gmra.mrb[0].mxu0 %v97
    %v236 = vpop.f32.mrb[0].mxu0
    %v237 = vadd.f32 %v54, %v236
    %v238 = vpop.f32.mrb[0].mxu0
    %239 = vmatprep.mubr.f32.mxu0 0.0
    %240 = vmatmul.mubr.f32.gmra.mrb[0].mxu0 %v100
    %v241 = vpop.f32.mrb[0].mxu0
    %v242 = vadd.f32 %v54, %v241
    %v243 = vpop.f32.mrb[0].mxu0
    %244 = vmatprep.mubr.f32.mxu0 0.0
    %245 = vmatmul.mubr.f32.gmra.mrb[0].mxu0 %v103
    %v246 = vpop.f32.mrb[0].mxu0
    %v247 = vadd.f32 %v54, %v246
    %v248 = vpop.f32.mrb[0].mxu0
    %249 = vdwg.mxu0
    %v250 = vmax.f32 %v172, 0.0
    %v251 = vmax.f32 %v177, 0.0
    %v252 = vmax.f32 %v182, 0.0
    %v253 = vmax.f32 %v187, 0.0
    %v254 = vmax.f32 %v192, 0.0
    %v255 = vmax.f32 %v197, 0.0
    %v256 = vmax.f32 %v202, 0.0
    %v257 = vmax.f32 %v207, 0.0
    %v258 = vmax.f32 %v212, 0.0
    %v259 = vmax.f32 %v217, 0.0
    %v260 = vmax.f32 %v222, 0.0
    %v261 = vmax.f32 %v227, 0.0
    %v262 = vmax.f32 %v232, 0.0
    %v263 = vmax.f32 %v237, 0.0
    %v264 = vmax.f32 %v242, 0.0
    %v265 = vmax.f32 %v247, 0.0
    %v266 = vld [vmem:[%s3] sm:$0xff]
    %v267 = vld [vmem:[%s3 + $0x8] sm:$0xff]
    %v268 = vld [vmem:[%s3 + $0x10] sm:$0xff]
    %v269 = vld [vmem:[%s3 + $0x18] sm:$0xff]
    %v270 = vld [vmem:[%s3 + $0x20] sm:$0xff]
    %v271 = vld [vmem:[%s3 + $0x28] sm:$0xff]
    %v272 = vld [vmem:[%s3 + $0x30] sm:$0xff]
    %v273 = vld [vmem:[%s3 + $0x38] sm:$0xff]
    %v274 = vld [vmem:[%s3 + $0x40] sm:$0xff]
    %v275 = vld [vmem:[%s3 + $0x48] sm:$0xff]
    %v276 = vld [vmem:[%s3 + $0x50] sm:$0xff]
    %v277 = vld [vmem:[%s3 + $0x58] sm:$0xff]
    %v278 = vld [vmem:[%s3 + $0x60] sm:$0xff]
    %v279 = vld [vmem:[%s3 + $0x68] sm:$0xff]
    %v280 = vld [vmem:[%s3 + $0x70] sm:$0xff]
    %v281 = vld [vmem:[%s3 + $0x78] sm:$0xff]
    %v282 = vld [vmem:[%s4] sm:$0x1]
    %v284 = vlaneseq
    %v285 = vshrl.u32 %v284, 7
    %v286 = vsub.s32 0, %v285
    %v287 = vrot.slane %v282, %v286
    %289 = vmatprep.subr.mxu0 0.0
    %290 = vmatpush1.msra.mxu0 %v266
    %291 = vmatprep.subr.mxu0 0.0
    %292 = vmatpush1.msra.mxu0 %v267
    %293 = vmatprep.subr.mxu0 0.0
    %294 = vmatpush1.msra.mxu0 %v268
    %295 = vmatprep.subr.mxu0 0.0
    %296 = vmatpush1.msra.mxu0 %v269
    %297 = vmatprep.subr.mxu0 0.0
    %298 = vmatpush1.msra.mxu0 %v270
    %299 = vmatprep.subr.mxu0 0.0
    %300 = vmatpush1.msra.mxu0 %v271
    %301 = vmatprep.subr.mxu0 0.0
    %302 = vmatpush1.msra.mxu0 %v272
    %303 = vmatprep.subr.mxu0 0.0
    %304 = vmatpush1.msra.mxu0 %v273
    %305 = vmatprep.subr.mxu0 0.0
    %306 = vmatpush1.msra.mxu0 %v274
    %307 = vmatprep.subr.mxu0 0.0
    %308 = vmatpush1.msra.mxu0 %v275
    %309 = vmatprep.subr.mxu0 0.0
    %310 = vmatpush1.msra.mxu0 %v276
    %311 = vmatprep.subr.mxu0 0.0
    %312 = vmatpush1.msra.mxu0 %v277
    %313 = vmatprep.subr.mxu0 0.0
    %314 = vmatpush1.msra.mxu0 %v278
    %315 = vmatprep.subr.mxu0 0.0
    %316 = vmatpush1.msra.mxu0 %v279
    %317 = vmatprep.subr.mxu0 0.0
    %318 = vmatpush1.msra.mxu0 %v280
    %319 = vmatprep.subr.mxu0 0.0
    %320 = vmatpush1.msra.mxu0 %v281
    %321 = vmatprep.subr.mxu0 0.0
    %322 = vmatpush1.msra.mxu0 0.0
    %323 = vmatprep.subr.mxu0 0.0
    %324 = vmatpush1.msra.mxu0 0.0
    %325 = vmatprep.subr.mxu0 0.0
    %326 = vmatpush1.msra.mxu0 0.0
    %327 = vmatprep.subr.mxu0 0.0
    %328 = vmatpush1.msra.mxu0 0.0
    %329 = vmatprep.subr.mxu0 0.0
    %330 = vmatpush1.msra.mxu0 0.0
    %331 = vmatprep.subr.mxu0 0.0
    %332 = vmatpush1.msra.mxu0 0.0
    %333 = vmatprep.subr.mxu0 0.0
    %334 = vmatpush1.msra.mxu0 0.0
    %335 = vmatprep.subr.mxu0 0.0
    %336 = vmatpush1.msra.mxu0 0.0
    %337 = vmatprep.subr.mxu0 0.0
    %338 = vmatpush1.msra.mxu0 0.0
    %339 = vmatprep.subr.mxu0 0.0
    %340 = vmatpush1.msra.mxu0 0.0
    %341 = vmatprep.subr.mxu0 0.0
    %342 = vmatpush1.msra.mxu0 0.0
    %343 = vmatprep.subr.mxu0 0.0
    %344 = vmatpush1.msra.mxu0 0.0
    %345 = vmatprep.subr.mxu0 0.0
    %346 = vmatpush1.msra.mxu0 0.0
    %347 = vmatprep.subr.mxu0 0.0
    %348 = vmatpush1.msra.mxu0 0.0
    %349 = vmatprep.subr.mxu0 0.0
    %350 = vmatpush1.msra.mxu0 0.0
    %351 = vmatprep.subr.mxu0 0.0
    %352 = vmatpush1.msra.mxu0 0.0
    %353 = vmatprep.mubr.f32.mxu0 0.0
    %354 = vmatmul.mubr.f32.gmra.mrb[0].mxu0 %v250
    %v355 = vpop.f32.mrb[0].mxu0
    %v356 = vadd.f32 %v287, %v355
    %v357 = vpop.f32.mrb[0].mxu0
    %358 = vmatprep.mubr.f32.mxu0 0.0
    %359 = vmatmul.mubr.f32.gmra.mrb[0].mxu0 %v251
    %v360 = vpop.f32.mrb[0].mxu0
    %v361 = vadd.f32 %v287, %v360
    %v362 = vpop.f32.mrb[0].mxu0
    %363 = vmatprep.mubr.f32.mxu0 0.0
    %364 = vmatmul.mubr.f32.gmra.mrb[0].mxu0 %v252
    %v365 = vpop.f32.mrb[0].mxu0
    %v366 = vadd.f32 %v287, %v365
    %v367 = vpop.f32.mrb[0].mxu0
    %368 = vmatprep.mubr.f32.mxu0 0.0
    %369 = vmatmul.mubr.f32.gmra.mrb[0].mxu0 %v253
    %v370 = vpop.f32.mrb[0].mxu0
    %v371 = vadd.f32 %v287, %v370
    %v372 = vpop.f32.mrb[0].mxu0
    %373 = vmatprep.mubr.f32.mxu0 0.0
    %374 = vmatmul.mubr.f32.gmra.mrb[0].mxu0 %v254
    %v375 = vpop.f32.mrb[0].mxu0
    %v376 = vadd.f32 %v287, %v375
    %v377 = vpop.f32.mrb[0].mxu0
    %378 = vmatprep.mubr.f32.mxu0 0.0
    %379 = vmatmul.mubr.f32.gmra.mrb[0].mxu0 %v255
    %v380 = vpop.f32.mrb[0].mxu0
    %v381 = vadd.f32 %v287, %v380
    %v382 = vpop.f32.mrb[0].mxu0
    %383 = vmatprep.mubr.f32.mxu0 0.0
    %384 = vmatmul.mubr.f32.gmra.mrb[0].mxu0 %v256
    %v385 = vpop.f32.mrb[0].mxu0
    %v386 = vadd.f32 %v287, %v385
    %v387 = vpop.f32.mrb[0].mxu0
    %388 = vmatprep.mubr.f32.mxu0 0.0
    %389 = vmatmul.mubr.f32.gmra.mrb[0].mxu0 %v257
    %v390 = vpop.f32.mrb[0].mxu0
    %v391 = vadd.f32 %v287, %v390
    %v392 = vpop.f32.mrb[0].mxu0
    %393 = vmatprep.mubr.f32.mxu0 0.0
    %394 = vmatmul.mubr.f32.gmra.mrb[0].mxu0 %v258
    %v395 = vpop.f32.mrb[0].mxu0
    %v396 = vadd.f32 %v287, %v395
    %v397 = vpop.f32.mrb[0].mxu0
    %398 = vmatprep.mubr.f32.mxu0 0.0
    %399 = vmatmul.mubr.f32.gmra.mrb[0].mxu0 %v259
    %v400 = vpop.f32.mrb[0].mxu0
    %v401 = vadd.f32 %v287, %v400
    %v402 = vpop.f32.mrb[0].mxu0
    %403 = vmatprep.mubr.f32.mxu0 0.0
    %404 = vmatmul.mubr.f32.gmra.mrb[0].mxu0 %v260
    %v405 = vpop.f32.mrb[0].mxu0
    %v406 = vadd.f32 %v287, %v405
    %v407 = vpop.f32.mrb[0].mxu0
    %408 = vmatprep.mubr.f32.mxu0 0.0
    %409 = vmatmul.mubr.f32.gmra.mrb[0].mxu0 %v261
    %v410 = vpop.f32.mrb[0].mxu0
    %v411 = vadd.f32 %v287, %v410
    %v412 = vpop.f32.mrb[0].mxu0
    %413 = vmatprep.mubr.f32.mxu0 0.0
    %414 = vmatmul.mubr.f32.gmra.mrb[0].mxu0 %v262
    %v415 = vpop.f32.mrb[0].mxu0
    %v416 = vadd.f32 %v287, %v415
    %v417 = vpop.f32.mrb[0].mxu0
    %418 = vmatprep.mubr.f32.mxu0 0.0
    %419 = vmatmul.mubr.f32.gmra.mrb[0].mxu0 %v263
    %v420 = vpop.f32.mrb[0].mxu0
    %v421 = vadd.f32 %v287, %v420
    %v422 = vpop.f32.mrb[0].mxu0
    %423 = vmatprep.mubr.f32.mxu0 0.0
    %424 = vmatmul.mubr.f32.gmra.mrb[0].mxu0 %v264
    %v425 = vpop.f32.mrb[0].mxu0
    %v426 = vadd.f32 %v287, %v425
    %v427 = vpop.f32.mrb[0].mxu0
    %428 = vmatprep.mubr.f32.mxu0 0.0
    %429 = vmatmul.mubr.f32.gmra.mrb[0].mxu0 %v265
    %v430 = vpop.f32.mrb[0].mxu0
    %v431 = vadd.f32 %v287, %v430
    %v432 = vpop.f32.mrb[0].mxu0
    %433 = vdwg.mxu0
    %v434 = vmax.f32 %v356, 0.0
    %v435 = vmax.f32 %v361, 0.0
    %v436 = vmax.f32 %v366, 0.0
    %v437 = vmax.f32 %v371, 0.0
    %v438 = vmax.f32 %v376, 0.0
    %v439 = vmax.f32 %v381, 0.0
    %v440 = vmax.f32 %v386, 0.0
    %v441 = vmax.f32 %v391, 0.0
    %v442 = vmax.f32 %v396, 0.0
    %v443 = vmax.f32 %v401, 0.0
    %v444 = vmax.f32 %v406, 0.0
    %v445 = vmax.f32 %v411, 0.0
    %v446 = vmax.f32 %v416, 0.0
    %v447 = vmax.f32 %v421, 0.0
    %v448 = vmax.f32 %v426, 0.0
    %v449 = vmax.f32 %v431, 0.0
    %v450 = vld [vmem:[%s5] sm:$0x1]
    %v452 = vlaneseq
    %v453 = vshrl.u32 %v452, 7
    %v454 = vsub.s32 0, %v453
    %v455 = vrot.slane %v450, %v454
    %v457 = vmul.f32 %v434, %v455
    %v458 = vmul.f32 %v435, %v455
    %v459 = vmul.f32 %v436, %v455
    %v460 = vmul.f32 %v437, %v455
    %v461 = vmul.f32 %v438, %v455
    %v462 = vmul.f32 %v439, %v455
    %v463 = vmul.f32 %v440, %v455
    %v464 = vmul.f32 %v441, %v455
    %v465 = vmul.f32 %v442, %v455
    %v466 = vmul.f32 %v443, %v455
    %v467 = vmul.f32 %v444, %v455
    %v468 = vmul.f32 %v445, %v455
    %v469 = vmul.f32 %v446, %v455
    %v470 = vmul.f32 %v447, %v455
    %v471 = vmul.f32 %v448, %v455
    %v472 = vmul.f32 %v449, %v455
    %473 = vadd.xlane.f32.xlu0 %v457
    %v474 = vpop.xlane.xlu0 %473
    %475 = vadd.xlane.f32.xlu0 %v458
    %v476 = vpop.xlane.xlu0 %475
    %477 = vadd.xlane.f32.xlu0 %v459
    %v478 = vpop.xlane.xlu0 %477
    %479 = vadd.xlane.f32.xlu0 %v460
    %v480 = vpop.xlane.xlu0 %479
    %481 = vadd.xlane.f32.xlu0 %v461
    %v482 = vpop.xlane.xlu0 %481
    %483 = vadd.xlane.f32.xlu0 %v462
    %v484 = vpop.xlane.xlu0 %483
    %485 = vadd.xlane.f32.xlu0 %v463
    %v486 = vpop.xlane.xlu0 %485
    %487 = vadd.xlane.f32.xlu0 %v464
    %v488 = vpop.xlane.xlu0 %487
    %489 = vadd.xlane.f32.xlu0 %v465
    %v490 = vpop.xlane.xlu0 %489
    %491 = vadd.xlane.f32.xlu0 %v466
    %v492 = vpop.xlane.xlu0 %491
    %493 = vadd.xlane.f32.xlu0 %v467
    %v494 = vpop.xlane.xlu0 %493
    %495 = vadd.xlane.f32.xlu0 %v468
    %v496 = vpop.xlane.xlu0 %495
    %497 = vadd.xlane.f32.xlu0 %v469
    %v498 = vpop.xlane.xlu0 %497
    %499 = vadd.xlane.f32.xlu0 %v470
    %v500 = vpop.xlane.xlu0 %499
    %501 = vadd.xlane.f32.xlu0 %v471
    %v502 = vpop.xlane.xlu0 %501
    %503 = vadd.xlane.f32.xlu0 %v472
    %v504 = vpop.xlane.xlu0 %503
    %v505 = vld [vmem:[#allocation2] sm:$0x1]
    %v507 = vlaneseq
    %v508 = vshrl.u32 %v507, 7
    %v509 = vsub.s32 0, %v508
    %v510 = vrot.slane %v505, %v509
    %v512 = vadd.f32 %v474, %v510
    %v513 = vadd.f32 %v476, %v510
    %v514 = vadd.f32 %v478, %v510
    %v515 = vadd.f32 %v480, %v510
    %v516 = vadd.f32 %v482, %v510
    %v517 = vadd.f32 %v484, %v510
    %v518 = vadd.f32 %v486, %v510
    %v519 = vadd.f32 %v488, %v510
    %v520 = vadd.f32 %v490, %v510
    %v521 = vadd.f32 %v492, %v510
    %v522 = vadd.f32 %v494, %v510
    %v523 = vadd.f32 %v496, %v510
    %v524 = vadd.f32 %v498, %v510
    %v525 = vadd.f32 %v500, %v510
    %v526 = vadd.f32 %v502, %v510
    %v527 = vadd.f32 %v504, %v510
    %544 = vset.pattern.permute.xlu0 0
    %545 = vperm.xlu0 %544, %v512
    %v546 = vpop.permute.xlu0 %545
    %547 = vset.pattern.permute.xlu0 0
    %548 = vperm.xlu0 %547, %v513
    %v549 = vpop.permute.xlu0 %548
    %550 = vset.pattern.permute.xlu0 0
    %551 = vperm.xlu0 %550, %v514
    %v552 = vpop.permute.xlu0 %551
    %553 = vset.pattern.permute.xlu0 0
    %554 = vperm.xlu0 %553, %v515
    %v555 = vpop.permute.xlu0 %554
    %556 = vset.pattern.permute.xlu0 0
    %557 = vperm.xlu0 %556, %v516
    %v558 = vpop.permute.xlu0 %557
    %559 = vset.pattern.permute.xlu0 0
    %560 = vperm.xlu0 %559, %v517
    %v561 = vpop.permute.xlu0 %560
    %562 = vset.pattern.permute.xlu0 0
    %563 = vperm.xlu0 %562, %v518
    %v564 = vpop.permute.xlu0 %563
    %565 = vset.pattern.permute.xlu0 0
    %566 = vperm.xlu0 %565, %v519
    %v567 = vpop.permute.xlu0 %566
    %568 = vset.pattern.permute.xlu0 0
    %569 = vperm.xlu0 %568, %v520
    %v570 = vpop.permute.xlu0 %569
    %571 = vset.pattern.permute.xlu0 0
    %572 = vperm.xlu0 %571, %v521
    %v573 = vpop.permute.xlu0 %572
    %574 = vset.pattern.permute.xlu0 0
    %575 = vperm.xlu0 %574, %v522
    %v576 = vpop.permute.xlu0 %575
    %577 = vset.pattern.permute.xlu0 0
    %578 = vperm.xlu0 %577, %v523
    %v579 = vpop.permute.xlu0 %578
    %580 = vset.pattern.permute.xlu0 0
    %581 = vperm.xlu0 %580, %v524
    %v582 = vpop.permute.xlu0 %581
    %583 = vset.pattern.permute.xlu0 0
    %584 = vperm.xlu0 %583, %v525
    %v585 = vpop.permute.xlu0 %584
    %586 = vset.pattern.permute.xlu0 0
    %587 = vperm.xlu0 %586, %v526
    %v588 = vpop.permute.xlu0 %587
    %589 = vset.pattern.permute.xlu0 0
    %590 = vperm.xlu0 %589, %v527
    %v591 = vpop.permute.xlu0 %590
    %v592 = vlaneseq
    %v593 = vand.u32 %v592, 127
    %v594 = vlaneseq
    %v595 = vshrl.u32 %v594, 7
    %v596 = vsub.s32 %v593, %v595
    %v597 = vrot.slane %v546, %v596
    %v598 = vadd.s32 %v593, 4294967288
    %v599 = vlaneseq
    %v600 = vshrl.u32 %v599, 7
    %v601 = vsub.s32 %v598, %v600
    %v602 = vrot.slane %v549, %v601
    %vm603 = vcmask 130112
    %v604 = vsel %vm603, %v602, %v597
    %v605 = vadd.s32 %v593, 4294967280
    %v606 = vlaneseq
    %v607 = vshrl.u32 %v606, 7
    %v608 = vsub.s32 %v605, %v607
    %v609 = vrot.slane %v552, %v608
    %vm610 = vcmask 195712
    %v611 = vsel %vm610, %v609, %v604
    %v612 = vadd.s32 %v593, 4294967272
    %v613 = vlaneseq
    %v614 = vshrl.u32 %v613, 7
    %v615 = vsub.s32 %v612, %v614
    %v616 = vrot.slane %v555, %v615
    %vm617 = vcmask 261312
    %v618 = vsel %vm617, %v616, %v611
    %v619 = vadd.s32 %v593, 4294967264
    %v620 = vlaneseq
    %v621 = vshrl.u32 %v620, 7
    %v622 = vsub.s32 %v619, %v621
    %v623 = vrot.slane %v558, %v622
    %vm624 = vcmask 326912
    %v625 = vsel %vm624, %v623, %v618
    %v626 = vadd.s32 %v593, 4294967256
    %v627 = vlaneseq
    %v628 = vshrl.u32 %v627, 7
    %v629 = vsub.s32 %v626, %v628
    %v630 = vrot.slane %v561, %v629
    %vm631 = vcmask 392512
    %v632 = vsel %vm631, %v630, %v625
    %v633 = vadd.s32 %v593, 4294967248
    %v634 = vlaneseq
    %v635 = vshrl.u32 %v634, 7
    %v636 = vsub.s32 %v633, %v635
    %v637 = vrot.slane %v564, %v636
    %vm638 = vcmask 458112
    %v639 = vsel %vm638, %v637, %v632
    %v640 = vadd.s32 %v593, 4294967240
    %v641 = vlaneseq
    %v642 = vshrl.u32 %v641, 7
    %v643 = vsub.s32 %v640, %v642
    %v644 = vrot.slane %v567, %v643
    %vm645 = vcmask 523712
    %v646 = vsel %vm645, %v644, %v639
    %v647 = vadd.s32 %v593, 4294967232
    %v648 = vlaneseq
    %v649 = vshrl.u32 %v648, 7
    %v650 = vsub.s32 %v647, %v649
    %v651 = vrot.slane %v570, %v650
    %vm652 = vcmask 589312
    %v653 = vsel %vm652, %v651, %v646
    %v654 = vadd.s32 %v593, 4294967224
    %v655 = vlaneseq
    %v656 = vshrl.u32 %v655, 7
    %v657 = vsub.s32 %v654, %v656
    %v658 = vrot.slane %v573, %v657
    %vm659 = vcmask 654912
    %v660 = vsel %vm659, %v658, %v653
    %v661 = vadd.s32 %v593, 4294967216
    %v662 = vlaneseq
    %v663 = vshrl.u32 %v662, 7
    %v664 = vsub.s32 %v661, %v663
    %v665 = vrot.slane %v576, %v664
    %vm666 = vcmask 720512
    %v667 = vsel %vm666, %v665, %v660
    %v668 = vadd.s32 %v593, 4294967208
    %v669 = vlaneseq
    %v670 = vshrl.u32 %v669, 7
    %v671 = vsub.s32 %v668, %v670
    %v672 = vrot.slane %v579, %v671
    %vm673 = vcmask 786112
    %v674 = vsel %vm673, %v672, %v667
    %v675 = vadd.s32 %v593, 4294967200
    %v676 = vlaneseq
    %v677 = vshrl.u32 %v676, 7
    %v678 = vsub.s32 %v675, %v677
    %v679 = vrot.slane %v582, %v678
    %vm680 = vcmask 851712
    %v681 = vsel %vm680, %v679, %v674
    %v682 = vadd.s32 %v593, 4294967192
    %v683 = vlaneseq
    %v684 = vshrl.u32 %v683, 7
    %v685 = vsub.s32 %v682, %v684
    %v686 = vrot.slane %v585, %v685
    %vm687 = vcmask 917312
    %v688 = vsel %vm687, %v686, %v681
    %v689 = vadd.s32 %v593, 4294967184
    %v690 = vlaneseq
    %v691 = vshrl.u32 %v690, 7
    %v692 = vsub.s32 %v689, %v691
    %v693 = vrot.slane %v588, %v692
    %vm694 = vcmask 982912
    %v695 = vsel %vm694, %v693, %v688
    %v696 = vadd.s32 %v593, 4294967176
    %v697 = vlaneseq
    %v698 = vshrl.u32 %v697, 7
    %v699 = vsub.s32 %v696, %v698
    %v700 = vrot.slane %v591, %v699
    %vm701 = vcmask 1048512
    %v702 = vsel %vm701, %v700, %v695
    %704 = vst [vmem:[#allocation3] sm:$0x1] %v702
    // Predicated region
    $region30: #{tpu_custom_call.1} parent=1 // pred_check
      _
    $region31: #{tpu_custom_call.1} parent=1 // pred_check_branch
      %706 = sbr.rel (0) target = $region33
    $region32: #{tpu_custom_call.1} parent=1 // pred_region
      %s708 = ssub.s32 16, 16
      %709 = vsyncadd [#allocation4], %s708
      %s711 = sshll.u32 [#allocation3], 4
      %s712 = int_to_ptr.vmem [resolvable:$true] %s711
      %714 = dma.vmem_to_hbm [thread:$0]  %s712, 16, %s7, [#allocation4]
    $region33: #{tpu_custom_call.1} parent=1 // pred_fallthru
      _
    // Predicated region
    $region34: #{tpu_custom_call.1} parent=1 // pred_check
      _
    $region35: #{tpu_custom_call.1} parent=1 // pred_check_branch
      %716 = sbr.rel (0) target = $region37
    $region36: #{tpu_custom_call.1} parent=1 // pred_region
      %717 = dma.done [#allocation4], 16
    $region37: #{tpu_custom_call.1} parent=1 // pred_fallthru
      _
    %718 = vsyncpa [#allocation4], 1

</llo_original>
